<compile_context>
chip_gen: v7x
topology: tpu7x:2x2x1
jax: 0.10.0
libtpu: 0.0.40
codegen_flags: <defaults>
</compile_context>

<pallas_src>
import functools

import jax
import jax.numpy as jnp
from jax.experimental import pallas as pl
from jax.experimental.pallas import tpu as pltpu


def ntn_kernel(x1_ref, x2_ref, w1_ref, w2_ref, b_ref, o_ref, *, num_k):
    """One batch tile: tanh(bilinear(x1,x2) + linear(concat(x1,x2))), fused."""
    x1 = x1_ref[...]                                   # (Bt, D)  activation dtype
    x2 = x2_ref[...]                                   # (Bt, D)
    mm_dtype = w1_ref.dtype                            # matmul dtype (bf16 by default)

    x1_m = x1.astype(mm_dtype)
    x2_m = x2.astype(mm_dtype)

    # --- MXU matmul #1: all K bilinear slices in one wide push -------------
    # T[b, k*D + j] = sum_i x1[b,i] * W[k,i,j]
    t = jnp.dot(x1_m, w1_ref[...], preferred_element_type=jnp.float32)   # (Bt, K*D) f32

    # Elementwise (VPU) in f32: G[b, k*D + j] = T[b, k*D + j] * x2[b, j]
    x2_f32 = x2.astype(jnp.float32)
    x2_rep = jnp.concatenate([x2_f32] * num_k, axis=-1)                  # (Bt, K*D)
    g = t * x2_rep                                                       # (Bt, K*D) f32

    # --- MXU matmul #2: grouped reduction (block-diag selector) fused with
    # both halves of the linear layer.  RHS2 = [selector; wl_top; wl_bot].
    lhs2 = jnp.concatenate([g.astype(mm_dtype), x1_m, x2_m], axis=-1)    # (Bt, K*D + 2D)
    o = jnp.dot(lhs2, w2_ref[...], preferred_element_type=jnp.float32)   # (Bt, Kp) f32
    o = o + b_ref[...]                                                   # f32 bias add

    o_ref[...] = jnp.tanh(o).astype(o_ref.dtype)                         # EUP tanh in f32


def _pick_block_b(B):
    # Large tiles amortize the ~0.35us/step overhead and fill the MXU M-dim,
    # but keep >= 2 grid steps when possible so both v7x TensorCores get work.
    for cand in (512, 256, 128, 64, 32, 16, 8):
        if B % cand == 0 and B // cand >= 2:
            return cand
    return B  # tiny batch: single tile (pure fixed overhead, nothing to split)


def ntn_forward(x1, x2, w_bilinear, w_linear, b_linear, *,
                block_b=None, mm_dtype=jnp.bfloat16):
    """x1, x2: (B, D); w_bilinear: (K, D, D); w_linear: (K, 2D); b_linear: (K,)."""
    B, D = x1.shape
    K = w_bilinear.shape[0]
    KD = K * D
    Kp = pl.cdiv(K, 128) * 128          # lane-dense (padded) output width

    # --- weight preprocessing (do once at param init in production) --------
    # W_flat[i, k*D + j] = W[k, i, j]
    w_flat = jnp.transpose(w_bilinear, (1, 0, 2)).reshape(D, KD).astype(mm_dtype)
    # Block-diagonal selector: sums each D-wide group -> one bilinear output.
    sel = jnp.repeat(jnp.eye(K, dtype=jnp.float32), D, axis=0)           # (K*D, K)
    rhs2 = jnp.concatenate([sel, jnp.transpose(w_linear)], axis=0)       # (K*D + 2D, K)
    rhs2 = jnp.pad(rhs2, ((0, 0), (0, Kp - K))).astype(mm_dtype)         # (K*D + 2D, Kp)
    bias = jnp.pad(b_linear.reshape(1, K).astype(jnp.float32),
                   ((0, 0), (0, Kp - K)))                                # (1, Kp)

    if block_b is None:
        block_b = _pick_block_b(B)
    assert block_b == B or (B % block_b == 0 and block_b % 8 == 0), \
        "block_b must equal B or be a multiple of 8 dividing B"

    grid = (B // block_b,)

    # --- VMEM budget (double-buffered pipeline + headroom, <= v7x 64 MiB) --
    mm_item = jnp.dtype(mm_dtype).itemsize
    act_item = jnp.dtype(x1.dtype).itemsize
    step_bytes = (2 * block_b * D * act_item          # x1 + x2 tiles
                  + block_b * Kp * act_item           # output tile
                  + D * KD * mm_item                  # W_flat (resident)
                  + (KD + 2 * D) * Kp * mm_item       # fused RHS2 (resident)
                  + Kp * 4)                           # bias
    vmem_limit = min(max(4 * step_bytes + (2 << 20), 16 << 20), 60 << 20)

    cost = pl.CostEstimate(
        flops=2 * B * D * KD + 2 * B * (KD + 2 * D) * Kp + B * KD,
        transcendentals=B * Kp,
        bytes_accessed=(2 * B * D * act_item + B * Kp * act_item
                        + D * KD * mm_item + (KD + 2 * D) * Kp * mm_item + Kp * 4),
    )

    out_padded = pl.pallas_call(
        functools.partial(ntn_kernel, num_k=K),
        out_shape=jax.ShapeDtypeStruct((B, Kp), x1.dtype),
        grid=grid,
        in_specs=[
            pl.BlockSpec((block_b, D), lambda i: (i, 0)),        # x1 tile
            pl.BlockSpec((block_b, D), lambda i: (i, 0)),        # x2 tile
            pl.BlockSpec((D, KD), lambda i: (0, 0)),             # W_flat (resident)
            pl.BlockSpec((KD + 2 * D, Kp), lambda i: (0, 0)),    # fused selector+linear
            pl.BlockSpec((1, Kp), lambda i: (0, 0)),             # bias
        ],
        out_specs=pl.BlockSpec((block_b, Kp), lambda i: (i, 0)),
        compiler_params=pltpu.CompilerParams(
            dimension_semantics=("parallel",),
            vmem_limit_bytes=int(vmem_limit),
        ),
        cost_estimate=cost,
    )(x1, x2, w_flat, rhs2, bias)

    # Lane-dense padded store inside the kernel; slice back to K here.
    return out_padded[:, :K]


if __name__ == "__main__":
    # Small, deterministic shapes consistent with the module.
    B = 8          # batch
    D = 32         # input_dim
    K = 2          # output_k

    key = jax.random.PRNGKey(0)
    k1, k2, k3, k4, k5 = jax.random.split(key, 5)

    x1 = jax.random.normal(k1, (B, D), dtype=jnp.float32)
    x2 = jax.random.normal(k2, (B, D), dtype=jnp.float32)
    # Parameters (shapes match nn.Bilinear(bias=False) / nn.Linear in __init__).
    w_bilinear = 0.1 * jax.random.normal(k3, (K, D, D), dtype=jnp.float32)   # Bilinear.weight
    w_linear = 0.1 * jax.random.normal(k4, (K, 2 * D), dtype=jnp.float32)    # Linear.weight
    b_linear = 0.1 * jax.random.normal(k5, (K,), dtype=jnp.float32)          # Linear.bias

    out = ntn_forward(x1, x2, w_bilinear, w_linear, b_linear)
    out = jax.block_until_ready(out)

    # Pure-JAX f32 reference of the PyTorch forward (dropout_rate=0.0 => identity).
    o1_ref = jnp.einsum('bi,kij,bj->bk', x1, w_bilinear, x2)
    o2_ref = jnp.concatenate([x1, x2], axis=-1) @ w_linear.T + b_linear
    ref = jnp.tanh(o1_ref + o2_ref)

    assert out.shape == (B, K)
    # bf16 matmul inputs with f32 accumulation => loose-but-meaningful tolerance.
    assert jnp.allclose(out, ref, atol=5e-2, rtol=5e-2), (out, ref)
    print("KERNEL_OK")
</pallas_src>

<mosaic_0001>
module attributes {stable_mosaic.version = 11 : i64} {
  func.func @ntn_kernel(%arg0: i32, %arg1: memref<8x32xf32, #tpu.memory_space<vmem>>, %arg2: memref<8x32xf32, #tpu.memory_space<vmem>>, %arg3: memref<32x64xbf16, #tpu.memory_space<vmem>>, %arg4: memref<128x128xbf16, #tpu.memory_space<vmem>>, %arg5: memref<1x128xf32, #tpu.memory_space<vmem>>, %arg6: memref<8x128xf32, #tpu.memory_space<vmem>>) attributes {dimension_semantics = [#tpu.dimension_semantics<parallel>], iteration_bounds = array<i64: 1>, scalar_prefetch = 0 : i64, scratch_operands = 0 : i64, tpu.core_type = #tpu.core_type<tc>, window_params = [{transform_indices = @transform_0, window_bounds = array<i64: 8, 32>}, {transform_indices = @transform_1, window_bounds = array<i64: 8, 32>}, {pipeline_mode = #tpu.pipeline_mode<synchronous>, transform_indices = @transform_2, window_bounds = array<i64: 32, 64>}, {pipeline_mode = #tpu.pipeline_mode<synchronous>, transform_indices = @transform_3, window_bounds = array<i64: 128, 128>}, {pipeline_mode = #tpu.pipeline_mode<synchronous>, transform_indices = @transform_4, window_bounds = array<i64: 1, 128>}, {transform_indices = @transform_5, window_bounds = array<i64: 8, 128>}]} {
    %c0 = arith.constant 0 : index
    %c0_0 = arith.constant 0 : index
    %0 = vector.load %arg1[%c0, %c0_0] : memref<8x32xf32, #tpu.memory_space<vmem>>, vector<8x32xf32>
    %c0_1 = arith.constant 0 : index
    %c0_2 = arith.constant 0 : index
    %1 = vector.load %arg2[%c0_1, %c0_2] : memref<8x32xf32, #tpu.memory_space<vmem>>, vector<8x32xf32>
    %2 = arith.truncf %0 : vector<8x32xf32> to vector<8x32xbf16>
    %3 = arith.truncf %1 : vector<8x32xf32> to vector<8x32xbf16>
    %c0_3 = arith.constant 0 : index
    %c0_4 = arith.constant 0 : index
    %4 = vector.load %arg3[%c0_3, %c0_4] : memref<32x64xbf16, #tpu.memory_space<vmem>>, vector<32x64xbf16>
    %cst = arith.constant dense<0.000000e+00> : vector<8x64xf32>
    %5 = tpu.matmul %2, %4, %cst {dimension_numbers = #tpu.dot_dimension_numbers<[1], [0], [0], [1], [0, 0, 1, 1], [], []>} : vector<8x32xbf16>, vector<32x64xbf16>, vector<8x64xf32> -> vector<8x64xf32>
    %6 = tpu.concatenate %1, %1 in 1 : vector<8x32xf32>, vector<8x32xf32> -> vector<8x64xf32>
    %7 = arith.mulf %5, %6 : vector<8x64xf32>
    %8 = arith.truncf %7 : vector<8x64xf32> to vector<8x64xbf16>
    %9 = tpu.concatenate %8, %2, %3 in 1 : vector<8x64xbf16>, vector<8x32xbf16>, vector<8x32xbf16> -> vector<8x128xbf16>
    %c0_5 = arith.constant 0 : index
    %c0_6 = arith.constant 0 : index
    %10 = vector.load %arg4[%c0_5, %c0_6] : memref<128x128xbf16, #tpu.memory_space<vmem>>, vector<128x128xbf16>
    %cst_7 = arith.constant dense<0.000000e+00> : vector<8x128xf32>
    %11 = tpu.matmul %9, %10, %cst_7 {dimension_numbers = #tpu.dot_dimension_numbers<[1], [0], [0], [1], [0, 0, 1, 1], [], []>} : vector<8x128xbf16>, vector<128x128xbf16>, vector<8x128xf32> -> vector<8x128xf32>
    %c0_8 = arith.constant 0 : index
    %c0_9 = arith.constant 0 : index
    %12 = vector.load %arg5[%c0_8, %c0_9] : memref<1x128xf32, #tpu.memory_space<vmem>>, vector<1x128xf32>
    %13 = vector.broadcast %12 : vector<1x128xf32> to vector<8x128xf32>
    %14 = arith.addf %11, %13 : vector<8x128xf32>
    %15 = math.tanh %14 : vector<8x128xf32>
    %c0_10 = arith.constant 0 : index
    %c0_11 = arith.constant 0 : index
    %16 = vector.load %arg6[%c0_10, %c0_11] : memref<8x128xf32, #tpu.memory_space<vmem>>, vector<8x128xf32>
    tpu.vector_store %arg6[%c0_10, %c0_11], %15 {strides = array<i32>} : memref<8x128xf32, #tpu.memory_space<vmem>>, vector<8x128xf32>,
    return
  }
  func.func @transform_0(%arg0: i32) -> (i32, i32) {
    %c0_i32 = arith.constant 0 : i32
    %c0_i32_0 = arith.constant 0 : i32
    return %arg0, %c0_i32 : i32, i32
  }
  func.func @transform_1(%arg0: i32) -> (i32, i32) {
    %c0_i32 = arith.constant 0 : i32
    %c0_i32_0 = arith.constant 0 : i32
    return %arg0, %c0_i32 : i32, i32
  }
  func.func @transform_2(%arg0: i32) -> (i32, i32) {
    %c0_i32 = arith.constant 0 : i32
    %c0_i32_0 = arith.constant 0 : i32
    %c0_i32_1 = arith.constant 0 : i32
    return %c0_i32, %c0_i32_0 : i32, i32
  }
  func.func @transform_3(%arg0: i32) -> (i32, i32) {
    %c0_i32 = arith.constant 0 : i32
    %c0_i32_0 = arith.constant 0 : i32
    %c0_i32_1 = arith.constant 0 : i32
    return %c0_i32, %c0_i32_0 : i32, i32
  }
  func.func @transform_4(%arg0: i32) -> (i32, i32) {
    %c0_i32 = arith.constant 0 : i32
    %c0_i32_0 = arith.constant 0 : i32
    %c0_i32_1 = arith.constant 0 : i32
    return %c0_i32, %c0_i32_0 : i32, i32
  }
  func.func @transform_5(%arg0: i32) -> (i32, i32) {
    %c0_i32 = arith.constant 0 : i32
    %c0_i32_0 = arith.constant 0 : i32
    return %arg0, %c0_i32 : i32, i32
  }
}

</mosaic_0001>

<llo_original>
// kernel: tpu_custom_call.1
$region0: #{tpu_custom_call.1}
  #allocation0 [shape = 'u32[]', space=smem, size = 0x4, offset = 0x4, fixed_abs, tag = 'smem constant byte address 0x4 - core index']
  #allocation1 [shape = 'u32[144,128]{1,0:T(1,128)}', space=vmem, size = 0x12000, scoped, tag = 'internal scratch']
  %s0 = inlined_call_operand.hbm [shape: f32[8,32], index: 0, kind: input, shape index: {}]
  %s1 = inlined_call_operand.hbm [shape: f32[8,32], index: 1, kind: input, shape index: {}]
  %s2 = inlined_call_operand.hbm [shape: bf16[32,64], index: 2, kind: input, shape index: {}]
  %s3 = inlined_call_operand.hbm [shape: bf16[128,128], index: 3, kind: input, shape index: {}]
  %s4 = inlined_call_operand.vmem [shape: f32[1,128], index: 4, kind: input, shape index: {}]
  %s5 = inlined_call_operand.hbm [shape: f32[8,128], index: 5, kind: output, shape index: {}]
  %s6 = sld [smem:[#allocation0]]
  $region46: #{tpu_custom_call.1} parent=0
    _
  %s8 = ssub.s32 1, %s6
  %s9 = scalar_select 0, %s8, %s6
  $region1: #{tpu_custom_call.1} parent=0
    #allocation2 [shape = 'u8[4096]{0}', space=vmem, size = 0x1000, scoped, tag = 'input window, operand 0, single buffered']
    #allocation3 [shape = 's32[1]{0}', space=sflag, size = 0x4, scoped, tag = 'scoped memory for tpu_custom_call.1']
    #allocation4 [shape = 's32[1]{0}', space=sflag, size = 0x4, scoped, tag = 'scoped memory for tpu_custom_call.1']
    #allocation5 [shape = 'u8[4096]{0}', space=vmem, size = 0x1000, scoped, tag = 'input window, operand 1, single buffered']
    #allocation6 [shape = 's32[1]{0}', space=sflag, size = 0x4, scoped, tag = 'scoped memory for tpu_custom_call.1']
    #allocation7 [shape = 'u8[8192]{0}', space=vmem, size = 0x2000, scoped, tag = 'input window, operand 2, single buffered']
    #allocation8 [shape = 'u8[32768]{0}', space=vmem, size = 0x8000, scoped, tag = 'input window, operand 3, single buffered']
    #allocation9 [shape = 's32[1]{0}', space=sflag, size = 0x4, scoped, tag = 'scoped memory for tpu_custom_call.1']
    #allocation10 [shape = 'u8[4096]{0}', space=vmem, size = 0x1000, scoped, tag = 'output window, operand 0, single buffered']
    %10 = vsyncpa [#allocation3], 0
    %11 = vsyncpa [#allocation6], 0
    %12 = vsyncpa [#allocation9], 0
    %13 = vsyncpa [#allocation4], 0
    // Predicated region
    $region2: #{tpu_custom_call.1} parent=1 // pred_check
      _
    $region3: #{tpu_custom_call.1} parent=1 // pred_check_branch
      %15 = sbr.rel (0) target = $region5
    $region4: #{tpu_custom_call.1} parent=1 // pred_region
      %s17 = ssub.s32 128, 128
      %18 = vsyncadd [#allocation3], %s17
      %s20 = sshll.u32 [#allocation2], 4
      %s21 = int_to_ptr.vmem [resolvable:$true] %s20
      %23 = dma.hbm_to_vmem [thread:$0]  %s0, 128, %s21, [#allocation3]
    $region5: #{tpu_custom_call.1} parent=1 // pred_fallthru
      _
    // Predicated region
    $region6: #{tpu_custom_call.1} parent=1 // pred_check
      _
    $region7: #{tpu_custom_call.1} parent=1 // pred_check_branch
      %25 = sbr.rel (0) target = $region9
    $region8: #{tpu_custom_call.1} parent=1 // pred_region
      %s27 = ssub.s32 128, 128
      %28 = vsyncadd [#allocation6], %s27
      %s30 = sshll.u32 [#allocation5], 4
      %s31 = int_to_ptr.vmem [resolvable:$true] %s30
      %33 = dma.hbm_to_vmem [thread:$0]  %s1, 128, %s31, [#allocation6]
    $region9: #{tpu_custom_call.1} parent=1 // pred_fallthru
      _
    // Predicated region
    $region10: #{tpu_custom_call.1} parent=1 // pred_check
      _
    $region11: #{tpu_custom_call.1} parent=1 // pred_check_branch
      %35 = sbr.rel (0) target = $region13
    $region12: #{tpu_custom_call.1} parent=1 // pred_region
      %s37 = ssub.s32 256, 256
      %38 = vsyncadd [#allocation6], %s37
      %s39 = sshll.u32 [#allocation7], 4
      %s40 = int_to_ptr.vmem [resolvable:$true] %s39
      %45 = dma.hbm_to_vmem [thread:$0]  %s2, 256, %s40, [#allocation6], 64, 64, 4
    $region13: #{tpu_custom_call.1} parent=1 // pred_fallthru
      _
    // Predicated region
    $region14: #{tpu_custom_call.1} parent=1 // pred_check
      _
    $region15: #{tpu_custom_call.1} parent=1 // pred_check_branch
      %47 = sbr.rel (0) target = $region17
    $region16: #{tpu_custom_call.1} parent=1 // pred_region
      %s49 = ssub.s32 1024, 1024
      %50 = vsyncadd [#allocation9], %s49
      %s51 = sshll.u32 [#allocation8], 4
      %s52 = int_to_ptr.vmem [resolvable:$true] %s51
      %57 = dma.hbm_to_vmem [thread:$0]  %s3, 1024, %s52, [#allocation9], 64, 64, 4
    $region17: #{tpu_custom_call.1} parent=1 // pred_fallthru
      _
    // Predicated region
    $region18: #{tpu_custom_call.1} parent=1 // pred_check
      _
    $region19: #{tpu_custom_call.1} parent=1 // pred_check_branch
      %59 = sbr.rel (0) target = $region21
    $region20: #{tpu_custom_call.1} parent=1 // pred_region
      _
    $region21: #{tpu_custom_call.1} parent=1 // pred_fallthru
      _
    // Predicated region
    $region22: #{tpu_custom_call.1} parent=1 // pred_check
      _
    $region23: #{tpu_custom_call.1} parent=1 // pred_check_branch
      %61 = sbr.rel (0) target = $region25
    $region24: #{tpu_custom_call.1} parent=1 // pred_region
      %62 = dma.done [#allocation3], 128
    $region25: #{tpu_custom_call.1} parent=1 // pred_fallthru
      _
    // Predicated region
    $region26: #{tpu_custom_call.1} parent=1 // pred_check
      _
    $region27: #{tpu_custom_call.1} parent=1 // pred_check_branch
      %64 = sbr.rel (0) target = $region29
    $region28: #{tpu_custom_call.1} parent=1 // pred_region
      %65 = dma.done [#allocation6], 128
    $region29: #{tpu_custom_call.1} parent=1 // pred_fallthru
      _
    // Predicated region
    $region30: #{tpu_custom_call.1} parent=1 // pred_check
      _
    $region31: #{tpu_custom_call.1} parent=1 // pred_check_branch
      %67 = sbr.rel (0) target = $region33
    $region32: #{tpu_custom_call.1} parent=1 // pred_region
      %68 = dma.done [#allocation6], 256
    $region33: #{tpu_custom_call.1} parent=1 // pred_fallthru
      _
    // Predicated region
    $region34: #{tpu_custom_call.1} parent=1 // pred_check
      _
    $region35: #{tpu_custom_call.1} parent=1 // pred_check_branch
      %70 = sbr.rel (0) target = $region37
    $region36: #{tpu_custom_call.1} parent=1 // pred_region
      %71 = dma.done [#allocation9], 1024
    $region37: #{tpu_custom_call.1} parent=1 // pred_fallthru
      _
    %v73 = vld [vmem:[#allocation2] sm:$0xff]
    %v74 = vld [vmem:[#allocation5] sm:$0xff]
    %v75 = vpack.c.bf16 %v73, %v73
    %v76 = vpack.c.bf16 %v74, %v74
    %v77 = vld [vmem:[#allocation7] sm:$0xf]
    %v78 = vld [vmem:[#allocation7 + $0x4] sm:$0xf]
    %v79 = vld [vmem:[#allocation7 + $0x8] sm:$0xf]
    %v80 = vld [vmem:[#allocation7 + $0xc] sm:$0xf]
    %v85 = vunpack.c.l.b16 %v77
    %v86 = vunpack.c.l.b16 %v78
    %v87 = vunpack.c.l.b16 %v79
    %v88 = vunpack.c.l.b16 %v80
    %v89 = vpack.c.b16 %v86, %v85
    %v90 = vpack.c.b16 %v88, %v87
    %vm93 = vcmask 261120
    %v95 = vsel %vm93, %v75, 0
    %97 = vmatprep.subr.bf16.mxu0 0
    %98 = vmatpush1.bf16.msra.mxu0 %v89
    %99 = vmatprep.subr.bf16.mxu0 0
    %100 = vmatpush1.bf16.msra.mxu0 %v90
    %101 = vmatprep.subr.bf16.mxu0 0
    %102 = vmatpush1.bf16.msra.mxu0 0
    %103 = vmatprep.subr.bf16.mxu0 0
    %104 = vmatpush1.bf16.msra.mxu0 0
    %105 = vmatprep.subr.bf16.mxu0 0
    %106 = vmatpush1.bf16.msra.mxu0 0
    %107 = vmatprep.subr.bf16.mxu0 0
    %108 = vmatpush1.bf16.msra.mxu0 0
    %109 = vmatprep.subr.bf16.mxu0 0
    %110 = vmatpush1.bf16.msra.mxu0 0
    %111 = vmatprep.subr.bf16.mxu0 0
    %112 = vmatpush1.bf16.msra.mxu0 0
    %113 = vmatprep.subr.bf16.mxu0 0
    %114 = vmatpush1.bf16.msra.mxu0 0
    %115 = vmatprep.subr.bf16.mxu0 0
    %116 = vmatpush1.bf16.msra.mxu0 0
    %117 = vmatprep.subr.bf16.mxu0 0
    %118 = vmatpush1.bf16.msra.mxu0 0
    %119 = vmatprep.subr.bf16.mxu0 0
    %120 = vmatpush1.bf16.msra.mxu0 0
    %121 = vmatprep.subr.bf16.mxu0 0
    %122 = vmatpush1.bf16.msra.mxu0 0
    %123 = vmatprep.subr.bf16.mxu0 0
    %124 = vmatpush1.bf16.msra.mxu0 0
    %125 = vmatprep.subr.bf16.mxu0 0
    %126 = vmatpush1.bf16.msra.mxu0 0
    %127 = vmatprep.subr.bf16.mxu0 0
    %128 = vmatpush1.bf16.msra.mxu0 0
    %129 = vmatprep.mubr.bf16.mxu0 0
    %130 = vmatmul.mubr.bf16.gmra.mrb[0].mxu0 %v95
    %v131 = vpop.f32.mrb[0].mxu0
    %v132 = vadd.f32 0.0, %v131
    %v133 = vpop.f32.mrb[0].mxu0
    %v134 = vpop.f32.mrb[0].mxu0
    %v135 = vpop.f32.mrb[0].mxu0
    %136 = vdwg.mxu0
    %138 = vrot.lane.b32.xlu0 %v74, 32
    %v139 = vpop.permute.xlu0 %138
    %v141 = vsel %vm93, %v74, %v139
    %v142 = vmul.f32 %v132, %v141
    %v143 = vpack.c.bf16 %v142, %v142
    %145 = vrot.lane.b32.xlu0 %v75, 64
    %v146 = vpop.permute.xlu0 %145
    %148 = vrot.lane.b32.xlu0 %v76, 96
    %v149 = vpop.permute.xlu0 %148
    %vm150 = vcmask 523264
    %v153 = vsel %vm150, %v143, %v146
    %vm154 = vcmask 785408
    %v156 = vsel %vm154, %v153, %v149
    %v158 = vld [vmem:[#allocation8] sm:$0xf]
    %v159 = vld [vmem:[#allocation8 + $0x4] sm:$0xf]
    %v160 = vld [vmem:[#allocation8 + $0x8] sm:$0xf]
    %v161 = vld [vmem:[#allocation8 + $0xc] sm:$0xf]
    %v162 = vld [vmem:[#allocation8 + $0x10] sm:$0xf]
    %v163 = vld [vmem:[#allocation8 + $0x14] sm:$0xf]
    %v164 = vld [vmem:[#allocation8 + $0x18] sm:$0xf]
    %v165 = vld [vmem:[#allocation8 + $0x1c] sm:$0xf]
    %v166 = vld [vmem:[#allocation8 + $0x20] sm:$0xf]
    %v167 = vld [vmem:[#allocation8 + $0x24] sm:$0xf]
    %v168 = vld [vmem:[#allocation8 + $0x28] sm:$0xf]
    %v169 = vld [vmem:[#allocation8 + $0x2c] sm:$0xf]
    %v170 = vld [vmem:[#allocation8 + $0x30] sm:$0xf]
    %v171 = vld [vmem:[#allocation8 + $0x34] sm:$0xf]
    %v172 = vld [vmem:[#allocation8 + $0x38] sm:$0xf]
    %v173 = vld [vmem:[#allocation8 + $0x3c] sm:$0xf]
    %v174 = vld [vmem:[%s4] sm:$0x1]
    %v176 = vlaneseq
    %v177 = vshrl.u32 %v176, 7
    %v178 = vsub.s32 0, %v177
    %v179 = vrot.slane %v174, %v178
    %v197 = vunpack.c.l.b16 %v158
    %v198 = vunpack.c.l.b16 %v159
    %v199 = vunpack.c.l.b16 %v160
    %v200 = vunpack.c.l.b16 %v161
    %v201 = vunpack.c.l.b16 %v162
    %v202 = vunpack.c.l.b16 %v163
    %v203 = vunpack.c.l.b16 %v164
    %v204 = vunpack.c.l.b16 %v165
    %v205 = vunpack.c.l.b16 %v166
    %v206 = vunpack.c.l.b16 %v167
    %v207 = vunpack.c.l.b16 %v168
    %v208 = vunpack.c.l.b16 %v169
    %v209 = vunpack.c.l.b16 %v170
    %v210 = vunpack.c.l.b16 %v171
    %v211 = vunpack.c.l.b16 %v172
    %v212 = vunpack.c.l.b16 %v173
    %v213 = vpack.c.b16 %v198, %v197
    %v214 = vpack.c.b16 %v200, %v199
    %v215 = vpack.c.b16 %v202, %v201
    %v216 = vpack.c.b16 %v204, %v203
    %v217 = vpack.c.b16 %v206, %v205
    %v218 = vpack.c.b16 %v208, %v207
    %v219 = vpack.c.b16 %v210, %v209
    %v220 = vpack.c.b16 %v212, %v211
    %229 = vmatprep.subr.bf16.mxu0 0
    %230 = vmatpush1.bf16.msra.mxu0 %v213
    %231 = vmatprep.subr.bf16.mxu0 0
    %232 = vmatpush1.bf16.msra.mxu0 %v214
    %233 = vmatprep.subr.bf16.mxu0 0
    %234 = vmatpush1.bf16.msra.mxu0 %v215
    %235 = vmatprep.subr.bf16.mxu0 0
    %236 = vmatpush1.bf16.msra.mxu0 %v216
    %237 = vmatprep.subr.bf16.mxu0 0
    %238 = vmatpush1.bf16.msra.mxu0 %v217
    %239 = vmatprep.subr.bf16.mxu0 0
    %240 = vmatpush1.bf16.msra.mxu0 %v218
    %241 = vmatprep.subr.bf16.mxu0 0
    %242 = vmatpush1.bf16.msra.mxu0 %v219
    %243 = vmatprep.subr.bf16.mxu0 0
    %244 = vmatpush1.bf16.msra.mxu0 %v220
    %245 = vmatprep.subr.bf16.mxu0 0
    %246 = vmatpush1.bf16.msra.mxu0 0
    %247 = vmatprep.subr.bf16.mxu0 0
    %248 = vmatpush1.bf16.msra.mxu0 0
    %249 = vmatprep.subr.bf16.mxu0 0
    %250 = vmatpush1.bf16.msra.mxu0 0
    %251 = vmatprep.subr.bf16.mxu0 0
    %252 = vmatpush1.bf16.msra.mxu0 0
    %253 = vmatprep.subr.bf16.mxu0 0
    %254 = vmatpush1.bf16.msra.mxu0 0
    %255 = vmatprep.subr.bf16.mxu0 0
    %256 = vmatpush1.bf16.msra.mxu0 0
    %257 = vmatprep.subr.bf16.mxu0 0
    %258 = vmatpush1.bf16.msra.mxu0 0
    %259 = vmatprep.subr.bf16.mxu0 0
    %260 = vmatpush1.bf16.msra.mxu0 0
    %261 = vmatprep.mubr.bf16.mxu0 0
    %262 = vmatmul.mubr.bf16.gmra.mrb[0].mxu0 %v156
    %v263 = vpop.f32.mrb[0].mxu0
    %v264 = vadd.f32 %v179, %v263
    %v265 = vpop.f32.mrb[0].mxu0
    %v266 = vpop.f32.mrb[0].mxu0
    %v267 = vpop.f32.mrb[0].mxu0
    %268 = vdwg.mxu0
    %v269 = vtanh.pop %v264
    %270 = vst [vmem:[#allocation10] sm:$0xff] %v269
    // Predicated region
    $region38: #{tpu_custom_call.1} parent=1 // pred_check
      _
    $region39: #{tpu_custom_call.1} parent=1 // pred_check_branch
      %272 = sbr.rel (0) target = $region41
    $region40: #{tpu_custom_call.1} parent=1 // pred_region
      %s274 = ssub.s32 128, 128
      %275 = vsyncadd [#allocation4], %s274
      %s277 = sshll.u32 [#allocation10], 4
      %s278 = int_to_ptr.vmem [resolvable:$true] %s277
      %280 = dma.vmem_to_hbm [thread:$0]  %s278, 128, %s5, [#allocation4]
    $region41: #{tpu_custom_call.1} parent=1 // pred_fallthru
      _
    // Predicated region
    $region42: #{tpu_custom_call.1} parent=1 // pred_check
      _
    $region43: #{tpu_custom_call.1} parent=1 // pred_check_branch
      %282 = sbr.rel (0) target = $region45
    $region44: #{tpu_custom_call.1} parent=1 // pred_region
      %283 = dma.done [#allocation4], 128
    $region45: #{tpu_custom_call.1} parent=1 // pred_fallthru
      _
    %284 = vsyncpa [#allocation3], 1
    %285 = vsyncpa [#allocation6], 1
    %286 = vsyncpa [#allocation9], 1
    %287 = vsyncpa [#allocation4], 1

</llo_original>
